<compile_context>
chip_gen: v6e
topology: v6e:2x2x1
jax: 0.10.0
libtpu: 0.0.40
codegen_flags: <defaults>
</compile_context>

<pallas_src>
import functools
import math

import jax
import jax.numpy as jnp
from jax.experimental import pallas as pl
from jax.experimental.pallas import tpu as pltpu

LANES = 128
SUBLANES = 8
MAX_TILE_BYTES = 2 * 1024 * 1024   # per-input tile cap (f32: 4096 rows)
NUM_SPLITS = 2                     # leading "parallel" grid axis (2 TCs on v7x)
_LN2 = math.log(2.0)


def _vreg_partial(t):
    """(R, 128) f32 -> (8, 128) partial sums using plain VPU adds."""
    r = t.shape[0]
    return jnp.sum(t.reshape(r // SUBLANES, SUBLANES, LANES), axis=0)


def _dice_bce_kernel(x_ref, y_ref, o_ref, a_acc, b_acc, c_acc, *,
                     steps_per_split, num_blocks, has_extra_step):
    s = pl.program_id(0)          # split ("parallel"; one per TensorCore)
    i = pl.program_id(1)          # step within the split ("arbitrary")

    @pl.when(i == 0)
    def _init():
        a_acc[...] = jnp.zeros_like(a_acc)
        b_acc[...] = jnp.zeros_like(b_acc)
        c_acc[...] = jnp.zeros_like(c_acc)

    def _accumulate():
        x = x_ref[...].astype(jnp.float32)
        y = y_ref[...].astype(jnp.float32)
        xy = x * y
        # Numerically-stable BCE-with-logits pieces:
        #   bce_elem = max(x,0) - x*y + log1p(exp(-|x|)) = a - xy
        a = jnp.maximum(x, 0.0) + jnp.log1p(jnp.exp(-jnp.abs(x)))
        a_acc[...] += _vreg_partial(a)
        b_acc[...] += _vreg_partial(xy)
        c_acc[...] += _vreg_partial(x + y)

    if has_extra_step:
        # The grid is padded to NUM_SPLITS * steps_per_split steps; the (at
        # most one) surplus step re-reads the last real block (clamped
        # index_map -> always an in-bounds DMA) and is simply skipped here.
        @pl.when(s * steps_per_split + i < num_blocks)
        def _maybe_accumulate():
            _accumulate()
    else:
        _accumulate()

    @pl.when(i == pl.num_programs(1) - 1)
    def _finalize():
        # Per-split partial sums, written as constant rows of this split's
        # (8,128) output block:
        #   row 0: sum(A), row 1: sum(x*y), row 2: sum(x) + sum(y)
        a_sum = jnp.sum(a_acc[...])
        b_sum = jnp.sum(b_acc[...])
        c_sum = jnp.sum(c_acc[...])
        row = jax.lax.broadcasted_iota(jnp.int32, (SUBLANES, LANES), 0)
        o_ref[...] = jnp.where(row == 0, a_sum,
                     jnp.where(row == 1, b_sum,
                     jnp.where(row == 2, c_sum, 0.0)))


def _partial_sums_xla(x, y):
    """XLA epilogue for the < one-tile row remainder (fused slice+reduce)."""
    x = x.astype(jnp.float32)
    y = y.astype(jnp.float32)
    a = jnp.sum(jnp.maximum(x, 0.0) + jnp.log1p(jnp.exp(-jnp.abs(x))))
    b = jnp.sum(x * y)
    c = jnp.sum(x) + jnp.sum(y)
    return a, b, c


def dice_bce_loss(inputs, targets, smooth=1.0, *, max_tile_rows=None):
    """Fused Pallas-TPU forward pass of DiceBCELoss (BCE-with-logits + Dice)."""
    assert inputs.shape == targets.shape, (inputs.shape, targets.shape)
    n_total = int(inputs.size)

    x_flat = inputs.reshape(-1)
    y_flat = targets.reshape(-1)

    # Sublane packing: (8,128) tiles for 32-bit, (16,128) bf16, (32,128) 8-bit.
    itemsizes = (jnp.dtype(inputs.dtype).itemsize, jnp.dtype(targets.dtype).itemsize)
    sub_mult = max(SUBLANES, SUBLANES * (4 // max(min(itemsizes), 1)))
    tile_cap = max(sub_mult, MAX_TILE_BYTES // (LANES * max(itemsizes)))
    if max_tile_rows is not None:
        tile_cap = max(sub_mult, (int(max_tile_rows) // sub_mult) * sub_mult)

    # Zero padding only when the flat size is not a multiple of 128 (or the
    # whole tensor is smaller than one aligned vreg block).  Each padded zero
    # contributes exactly ln(2) to sum(A) and nothing to the Dice sums.
    rows = pl.cdiv(n_total, LANES)
    rows_arr = max(rows, sub_mult)
    pad_elems = rows_arr * LANES - n_total
    if pad_elems:
        x_flat = jnp.pad(x_flat, (0, pad_elems))
        y_flat = jnp.pad(y_flat, (0, pad_elems))
    x2d = x_flat.reshape(rows_arr, LANES)
    y2d = y_flat.reshape(rows_arr, LANES)

    tile_rows = min(tile_cap, (rows_arr // sub_mult) * sub_mult)
    num_blocks = rows_arr // tile_rows            # whole blocks -> Pallas kernel
    kernel_rows = num_blocks * tile_rows
    num_splits = NUM_SPLITS if num_blocks >= NUM_SPLITS else 1
    steps_per_split = pl.cdiv(num_blocks, num_splits)
    has_extra_step = num_splits * steps_per_split != num_blocks

    if has_extra_step:
        last_block = num_blocks - 1
        in_map = lambda s, i: (jnp.minimum(s * steps_per_split + i, last_block), 0)
    else:
        in_map = lambda s, i: (s * steps_per_split + i, 0)

    kernel = functools.partial(
        _dice_bce_kernel,
        steps_per_split=steps_per_split,
        num_blocks=num_blocks,
        has_extra_step=has_extra_step)

    partials = pl.pallas_call(
        kernel,
        out_shape=jax.ShapeDtypeStruct((num_splits * SUBLANES, LANES), jnp.float32),
        grid_spec=pltpu.PrefetchScalarGridSpec(
            num_scalar_prefetch=0,
            grid=(num_splits, steps_per_split),
            in_specs=[
                pl.BlockSpec((tile_rows, LANES), in_map),
                pl.BlockSpec((tile_rows, LANES), in_map),
            ],
            out_specs=pl.BlockSpec((SUBLANES, LANES), lambda s, i: (s, 0)),
            scratch_shapes=[pltpu.VMEM((SUBLANES, LANES), jnp.float32)] * 3,
        ),
        compiler_params=pltpu.CompilerParams(
            dimension_semantics=("parallel", "arbitrary"),
            vmem_limit_bytes=32 * 1024 * 1024,
        ),
    )(x2d, y2d)

    partials = partials.reshape(num_splits, SUBLANES, LANES)
    a_tot = jnp.sum(partials[:, 0, 0])
    b_tot = jnp.sum(partials[:, 1, 0])
    c_tot = jnp.sum(partials[:, 2, 0])

    # Row remainder (< one tile): fused XLA epilogue, no padding, no extra
    # HBM pass over the bulk of the data.
    if kernel_rows < rows_arr:
        a_t, b_t, c_t = _partial_sums_xla(x2d[kernel_rows:], y2d[kernel_rows:])
        a_tot = a_tot + a_t
        b_tot = b_tot + b_t
        c_tot = c_tot + c_t

    smooth_f = jnp.float32(smooth)
    bce_sum = a_tot - b_tot - jnp.float32(pad_elems * _LN2)
    bce_mean = bce_sum / jnp.float32(n_total)
    dice = 1.0 - (2.0 * b_tot + smooth_f) / (c_tot + smooth_f)
    return bce_mean + dice


def _ref_dice_bce(inputs, targets, smooth=1.0):
    x = inputs.reshape(-1).astype(jnp.float32)
    y = targets.reshape(-1).astype(jnp.float32)
    bce = jnp.mean(jnp.maximum(x, 0.0) - x * y + jnp.log1p(jnp.exp(-jnp.abs(x))))
    inter = jnp.sum(x * y)
    dice = 1.0 - (2.0 * inter + smooth) / (jnp.sum(x) + jnp.sum(y) + smooth)
    return bce + dice


if __name__ == "__main__":
    key = jax.random.PRNGKey(0)

    def check(shape, idx, dtype=jnp.float32, max_tile_rows=None):
        k1, k2 = jax.random.split(jax.random.fold_in(key, idx))
        logits = jax.random.normal(k1, shape, dtype=jnp.float32).astype(dtype)
        targets = (jax.random.uniform(k2, shape) > 0.5).astype(dtype)
        got = jax.block_until_ready(
            dice_bce_loss(logits, targets, smooth=1.0, max_tile_rows=max_tile_rows))
        ref = _ref_dice_bce(logits, targets, smooth=1.0)
        assert jnp.allclose(got, ref, rtol=1e-5, atol=1e-4), (shape, dtype, got, ref)

    # Primary small NCHW case (single aligned block).
    check((2, 4, 16, 16), 0)
    # Ragged flat size (sub-lane zero pad + ln2 correction).
    check((2, 3, 17, 19), 1)
    # Larger aligned case (one big lane-dense block, no pad, no epilogue).
    check((2, 4, 256, 256), 2)
    # Multi-block + 2-way split with an odd block count (clamped duplicate
    # step that is skipped in-kernel).
    check((2, 4, 96, 96), 3, max_tile_rows=64)
    # Sub-lane pad + partial-tile row remainder (XLA epilogue) + 2-way split.
    check((2, 3, 50, 37), 4, max_tile_rows=32)
    # Tiny tensor (fewer rows than one aligned vreg block).
    check((3, 5, 7), 5)
    # bf16 inputs (packed (16,128) sublane alignment).
    check((2, 4, 16, 16), 6, dtype=jnp.bfloat16)

    print("KERNEL_OK")
</pallas_src>

<mosaic_0001>
module attributes {stable_mosaic.version = 11 : i64} {
  func.func @_dice_bce_kernel(%arg0: i32, %arg1: i32, %arg2: memref<16x128xf32, #tpu.memory_space<vmem>>, %arg3: memref<16x128xf32, #tpu.memory_space<vmem>>, %arg4: memref<8x128xf32, #tpu.memory_space<vmem>>, %arg5: memref<8x128xf32, #tpu.memory_space<vmem>>, %arg6: memref<8x128xf32, #tpu.memory_space<vmem>>, %arg7: memref<8x128xf32, #tpu.memory_space<vmem>>) attributes {dimension_semantics = [#tpu.dimension_semantics<parallel>, #tpu.dimension_semantics<arbitrary>], iteration_bounds = array<i64: 1, 1>, scalar_prefetch = 0 : i64, scratch_operands = 3 : i64, tpu.core_type = #tpu.core_type<tc>, window_params = [{transform_indices = @transform_0, window_bounds = array<i64: 16, 128>}, {transform_indices = @transform_1, window_bounds = array<i64: 16, 128>}, {transform_indices = @transform_2, window_bounds = array<i64: 8, 128>}]} {
    %c0_i32 = arith.constant 0 : i32
    %0 = arith.cmpi eq, %arg1, %c0_i32 : i32
    %1 = arith.extui %0 : i1 to i32
    %c0_i32_0 = arith.constant 0 : i32
    %2 = arith.cmpi ne, %1, %c0_i32_0 : i32
    scf.if %2 {
      %cst_22 = arith.constant 0.000000e+00 : f32
      %33 = vector.broadcast %cst_22 : f32 to vector<8x128xf32>
      %c0_23 = arith.constant 0 : index
      %c0_24 = arith.constant 0 : index
      %34 = vector.load %arg5[%c0_23, %c0_24] : memref<8x128xf32, #tpu.memory_space<vmem>>, vector<8x128xf32>
      tpu.vector_store %arg5[%c0_23, %c0_24], %33 {strides = array<i32>} : memref<8x128xf32, #tpu.memory_space<vmem>>, vector<8x128xf32>,
      %cst_25 = arith.constant 0.000000e+00 : f32
      %35 = vector.broadcast %cst_25 : f32 to vector<8x128xf32>
      %c0_26 = arith.constant 0 : index
      %c0_27 = arith.constant 0 : index
      %36 = vector.load %arg6[%c0_26, %c0_27] : memref<8x128xf32, #tpu.memory_space<vmem>>, vector<8x128xf32>
      tpu.vector_store %arg6[%c0_26, %c0_27], %35 {strides = array<i32>} : memref<8x128xf32, #tpu.memory_space<vmem>>, vector<8x128xf32>,
      %cst_28 = arith.constant 0.000000e+00 : f32
      %37 = vector.broadcast %cst_28 : f32 to vector<8x128xf32>
      %c0_29 = arith.constant 0 : index
      %c0_30 = arith.constant 0 : index
      %38 = vector.load %arg7[%c0_29, %c0_30] : memref<8x128xf32, #tpu.memory_space<vmem>>, vector<8x128xf32>
      tpu.vector_store %arg7[%c0_29, %c0_30], %37 {strides = array<i32>} : memref<8x128xf32, #tpu.memory_space<vmem>>, vector<8x128xf32>,
    } else {
    }
    %c0 = arith.constant 0 : index
    %c0_1 = arith.constant 0 : index
    %3 = vector.load %arg2[%c0, %c0_1] : memref<16x128xf32, #tpu.memory_space<vmem>>, vector<16x128xf32>
    %c0_2 = arith.constant 0 : index
    %c0_3 = arith.constant 0 : index
    %4 = vector.load %arg3[%c0_2, %c0_3] : memref<16x128xf32, #tpu.memory_space<vmem>>, vector<16x128xf32>
    %5 = arith.mulf %3, %4 : vector<16x128xf32>
    %cst = arith.constant 0.000000e+00 : f32
    %6 = vector.broadcast %cst : f32 to vector<16x128xf32>
    %7 = arith.maximumf %3, %6 : vector<16x128xf32>
    %8 = math.absf %3 : vector<16x128xf32>
    %cst_4 = arith.constant 0.000000e+00 : f32
    %9 = vector.broadcast %cst_4 : f32 to vector<16x128xf32>
    %10 = arith.subf %9, %8 : vector<16x128xf32>
    %11 = math.exp %10 : vector<16x128xf32>
    %12 = math.log1p %11 : vector<16x128xf32>
    %13 = arith.addf %7, %12 : vector<16x128xf32>
    %c0_5 = arith.constant 0 : index
    %c0_6 = arith.constant 0 : index
    %14 = vector.load %arg5[%c0_5, %c0_6] : memref<8x128xf32, #tpu.memory_space<vmem>>, vector<8x128xf32>
    %15 = vector.shape_cast %13 : vector<16x128xf32> to vector<2x8x128xf32>
    %cst_7 = arith.constant dense<0.000000e+00> : vector<8x128xf32>
    %16 = vector.multi_reduction <add>, %15, %cst_7 [0] : vector<2x8x128xf32> to vector<8x128xf32>
    %17 = arith.addf %14, %16 : vector<8x128xf32>
    %c0_8 = arith.constant 0 : index
    %c0_9 = arith.constant 0 : index
    %18 = vector.load %arg5[%c0_8, %c0_9] : memref<8x128xf32, #tpu.memory_space<vmem>>, vector<8x128xf32>
    tpu.vector_store %arg5[%c0_8, %c0_9], %17 {strides = array<i32>} : memref<8x128xf32, #tpu.memory_space<vmem>>, vector<8x128xf32>,
    %c0_10 = arith.constant 0 : index
    %c0_11 = arith.constant 0 : index
    %19 = vector.load %arg6[%c0_10, %c0_11] : memref<8x128xf32, #tpu.memory_space<vmem>>, vector<8x128xf32>
    %20 = vector.shape_cast %5 : vector<16x128xf32> to vector<2x8x128xf32>
    %cst_12 = arith.constant dense<0.000000e+00> : vector<8x128xf32>
    %21 = vector.multi_reduction <add>, %20, %cst_12 [0] : vector<2x8x128xf32> to vector<8x128xf32>
    %22 = arith.addf %19, %21 : vector<8x128xf32>
    %c0_13 = arith.constant 0 : index
    %c0_14 = arith.constant 0 : index
    %23 = vector.load %arg6[%c0_13, %c0_14] : memref<8x128xf32, #tpu.memory_space<vmem>>, vector<8x128xf32>
    tpu.vector_store %arg6[%c0_13, %c0_14], %22 {strides = array<i32>} : memref<8x128xf32, #tpu.memory_space<vmem>>, vector<8x128xf32>,
    %c0_15 = arith.constant 0 : index
    %c0_16 = arith.constant 0 : index
    %24 = vector.load %arg7[%c0_15, %c0_16] : memref<8x128xf32, #tpu.memory_space<vmem>>, vector<8x128xf32>
    %25 = arith.addf %3, %4 : vector<16x128xf32>
    %26 = vector.shape_cast %25 : vector<16x128xf32> to vector<2x8x128xf32>
    %cst_17 = arith.constant dense<0.000000e+00> : vector<8x128xf32>
    %27 = vector.multi_reduction <add>, %26, %cst_17 [0] : vector<2x8x128xf32> to vector<8x128xf32>
    %28 = arith.addf %24, %27 : vector<8x128xf32>
    %c0_18 = arith.constant 0 : index
    %c0_19 = arith.constant 0 : index
    %29 = vector.load %arg7[%c0_18, %c0_19] : memref<8x128xf32, #tpu.memory_space<vmem>>, vector<8x128xf32>
    tpu.vector_store %arg7[%c0_18, %c0_19], %28 {strides = array<i32>} : memref<8x128xf32, #tpu.memory_space<vmem>>, vector<8x128xf32>,
    %c0_i32_20 = arith.constant 0 : i32
    %30 = arith.cmpi eq, %arg1, %c0_i32_20 : i32
    %31 = arith.extui %30 : i1 to i32
    %c0_i32_21 = arith.constant 0 : i32
    %32 = arith.cmpi ne, %31, %c0_i32_21 : i32
    scf.if %32 {
      %c0_22 = arith.constant 0 : index
      %c0_23 = arith.constant 0 : index
      %33 = vector.load %arg5[%c0_22, %c0_23] : memref<8x128xf32, #tpu.memory_space<vmem>>, vector<8x128xf32>
      %34 = vector.shape_cast %33 : vector<8x128xf32> to vector<1x8x128xf32>
      %cst_24 = arith.constant dense<0.000000e+00> : vector<1xf32>
      %35 = vector.multi_reduction <add>, %34, %cst_24 [1, 2] : vector<1x8x128xf32> to vector<1xf32>
      %36 = vector.shape_cast %35 : vector<1xf32> to vector<1x1x1xf32>
      %37 = vector.extract %36[0, 0, 0] : f32 from vector<1x1x1xf32>
      %c0_25 = arith.constant 0 : index
      %c0_26 = arith.constant 0 : index
      %38 = vector.load %arg6[%c0_25, %c0_26] : memref<8x128xf32, #tpu.memory_space<vmem>>, vector<8x128xf32>
      %39 = vector.shape_cast %38 : vector<8x128xf32> to vector<1x8x128xf32>
      %cst_27 = arith.constant dense<0.000000e+00> : vector<1xf32>
      %40 = vector.multi_reduction <add>, %39, %cst_27 [1, 2] : vector<1x8x128xf32> to vector<1xf32>
      %41 = vector.shape_cast %40 : vector<1xf32> to vector<1x1x1xf32>
      %42 = vector.extract %41[0, 0, 0] : f32 from vector<1x1x1xf32>
      %c0_28 = arith.constant 0 : index
      %c0_29 = arith.constant 0 : index
      %43 = vector.load %arg7[%c0_28, %c0_29] : memref<8x128xf32, #tpu.memory_space<vmem>>, vector<8x128xf32>
      %44 = vector.shape_cast %43 : vector<8x128xf32> to vector<1x8x128xf32>
      %cst_30 = arith.constant dense<0.000000e+00> : vector<1xf32>
      %45 = vector.multi_reduction <add>, %44, %cst_30 [1, 2] : vector<1x8x128xf32> to vector<1xf32>
      %46 = vector.shape_cast %45 : vector<1xf32> to vector<1x1x1xf32>
      %47 = vector.extract %46[0, 0, 0] : f32 from vector<1x1x1xf32>
      %48 = tpu.iota {dimensions = array<i32: 0>} : vector<8x128xi32>
      %c0_i32_31 = arith.constant 0 : i32
      %49 = vector.broadcast %c0_i32_31 : i32 to vector<8x128xi32>
      %50 = arith.cmpi eq, %48, %49 : vector<8x128xi32>
      %c1_i32 = arith.constant 1 : i32
      %51 = vector.broadcast %c1_i32 : i32 to vector<8x128xi32>
      %52 = arith.cmpi eq, %48, %51 : vector<8x128xi32>
      %c2_i32 = arith.constant 2 : i32
      %53 = vector.broadcast %c2_i32 : i32 to vector<8x128xi32>
      %54 = arith.cmpi eq, %48, %53 : vector<8x128xi32>
      %cst_32 = arith.constant 0.000000e+00 : f32
      %55 = vector.broadcast %47 : f32 to vector<8x128xf32>
      %56 = vector.broadcast %cst_32 : f32 to vector<8x128xf32>
      %57 = arith.select %54, %55, %56 : vector<8x128xi1>, vector<8x128xf32>
      %58 = vector.broadcast %42 : f32 to vector<8x128xf32>
      %59 = arith.select %52, %58, %57 : vector<8x128xi1>, vector<8x128xf32>
      %60 = vector.broadcast %37 : f32 to vector<8x128xf32>
      %61 = arith.select %50, %60, %59 : vector<8x128xi1>, vector<8x128xf32>
      %c0_33 = arith.constant 0 : index
      %c0_34 = arith.constant 0 : index
      %62 = vector.load %arg4[%c0_33, %c0_34] : memref<8x128xf32, #tpu.memory_space<vmem>>, vector<8x128xf32>
      tpu.vector_store %arg4[%c0_33, %c0_34], %61 {strides = array<i32>} : memref<8x128xf32, #tpu.memory_space<vmem>>, vector<8x128xf32>,
    } else {
    }
    return
  }
  func.func @transform_0(%arg0: i32, %arg1: i32) -> (i32, i32) {
    %c1_i32 = arith.constant 1 : i32
    %0 = arith.muli %arg0, %c1_i32 : i32
    %1 = arith.addi %0, %arg1 : i32
    %c0_i32 = arith.constant 0 : i32
    %c0_i32_0 = arith.constant 0 : i32
    return %1, %c0_i32 : i32, i32
  }
  func.func @transform_1(%arg0: i32, %arg1: i32) -> (i32, i32) {
    %c1_i32 = arith.constant 1 : i32
    %0 = arith.muli %arg0, %c1_i32 : i32
    %1 = arith.addi %0, %arg1 : i32
    %c0_i32 = arith.constant 0 : i32
    %c0_i32_0 = arith.constant 0 : i32
    return %1, %c0_i32 : i32, i32
  }
  func.func @transform_2(%arg0: i32, %arg1: i32) -> (i32, i32) {
    %c0_i32 = arith.constant 0 : i32
    %c0_i32_0 = arith.constant 0 : i32
    return %arg0, %c0_i32 : i32, i32
  }
}

</mosaic_0001>

<llo_original>
// kernel: tpu_custom_call.1
$region0: #{tpu_custom_call.1}
  #allocation0 [shape = 'u32[]', space=smem, size = 0x4, offset = 0x4, fixed_abs, tag = 'smem constant byte address 0x4 - core index']
  #allocation1 [shape = 'u32[144,128]{1,0:T(1,128)}', space=vmem, size = 0x12000, scoped, tag = 'internal scratch']
  #allocation2 [shape = 'f32[8,128]{1,0:T(8,128)}', space=vmem, size = 0x1000, scoped, tag = 'scratch operand']
  #allocation3 [shape = 'f32[8,128]{1,0:T(8,128)}', space=vmem, size = 0x1000, scoped, tag = 'scratch operand']
  #allocation4 [shape = 'f32[8,128]{1,0:T(8,128)}', space=vmem, size = 0x1000, scoped, tag = 'scratch operand']
  %s0 = inlined_call_operand.hbm [shape: f32[16,128], index: 0, kind: input, shape index: {}]
  %s1 = inlined_call_operand.hbm [shape: f32[16,128], index: 1, kind: input, shape index: {}]
  %s2 = inlined_call_operand.hbm [shape: f32[8,128], index: 2, kind: output, shape index: {}]
  %s3 = sld [smem:[#allocation0]]
  $region34: #{tpu_custom_call.1} parent=0
    _
  %s5 = ssub.s32 1, %s3
  %s6 = scalar_select 0, %s5, %s3
  $region1: #{tpu_custom_call.1} parent=0
    #allocation5 [shape = 'u8[8192]{0}', space=vmem, size = 0x2000, scoped, tag = 'input window, operand 0, single buffered']
    #allocation6 [shape = 's32[1]{0}', space=sflag, size = 0x4, scoped, tag = 'scoped memory for tpu_custom_call.1']
    #allocation7 [shape = 's32[1]{0}', space=sflag, size = 0x4, scoped, tag = 'scoped memory for tpu_custom_call.1']
    #allocation8 [shape = 'u8[8192]{0}', space=vmem, size = 0x2000, scoped, tag = 'input window, operand 1, single buffered']
    #allocation9 [shape = 's32[1]{0}', space=sflag, size = 0x4, scoped, tag = 'scoped memory for tpu_custom_call.1']
    #allocation10 [shape = 'u8[4096]{0}', space=vmem, size = 0x1000, scoped, tag = 'output window, operand 0, single buffered']
    %7 = vsyncpa [#allocation6], 0
    %8 = vsyncpa [#allocation9], 0
    %9 = vsyncpa [#allocation7], 0
    // Predicated region
    $region2: #{tpu_custom_call.1} parent=1 // pred_check
      _
    $region3: #{tpu_custom_call.1} parent=1 // pred_check_branch
      %11 = sbr.rel (0) target = $region5
    $region4: #{tpu_custom_call.1} parent=1 // pred_region
      %s12 = sadd.s32 0, 0
      %s13 = smul.u32 2, %s12
      %s15 = ssub.s32 256, 256
      %16 = vsyncadd [#allocation6], %s15
      %s17 = smul.addr %s13, 128
      %s18 = scalar_lea.hbm %s0, %s17
      %s19 = sshll.u32 [#allocation5], 4
      %s20 = int_to_ptr.vmem [resolvable:$true] %s19
      %25 = dma.hbm_to_vmem [thread:$0]  %s18, 256, %s20, [#allocation6], 128, 128, 8
    $region5: #{tpu_custom_call.1} parent=1 // pred_fallthru
      _
    // Predicated region
    $region6: #{tpu_custom_call.1} parent=1 // pred_check
      _
    $region7: #{tpu_custom_call.1} parent=1 // pred_check_branch
      %27 = sbr.rel (0) target = $region9
    $region8: #{tpu_custom_call.1} parent=1 // pred_region
      %s28 = sadd.s32 0, 0
      %s29 = smul.u32 2, %s28
      %s31 = ssub.s32 256, 256
      %32 = vsyncadd [#allocation9], %s31
      %s33 = smul.addr %s29, 128
      %s34 = scalar_lea.hbm %s1, %s33
      %s35 = sshll.u32 [#allocation8], 4
      %s36 = int_to_ptr.vmem [resolvable:$true] %s35
      %41 = dma.hbm_to_vmem [thread:$0]  %s34, 256, %s36, [#allocation9], 128, 128, 8
    $region9: #{tpu_custom_call.1} parent=1 // pred_fallthru
      _
    // Predicated region
    $region10: #{tpu_custom_call.1} parent=1 // pred_check
      _
    $region11: #{tpu_custom_call.1} parent=1 // pred_check_branch
      %43 = sbr.rel (0) target = $region13
    $region12: #{tpu_custom_call.1} parent=1 // pred_region
      %44 = dma.done [#allocation6], 256
    $region13: #{tpu_custom_call.1} parent=1 // pred_fallthru
      _
    // Predicated region
    $region14: #{tpu_custom_call.1} parent=1 // pred_check
      _
    $region15: #{tpu_custom_call.1} parent=1 // pred_check_branch
      %46 = sbr.rel (0) target = $region17
    $region16: #{tpu_custom_call.1} parent=1 // pred_region
      %47 = dma.done [#allocation9], 256
    $region17: #{tpu_custom_call.1} parent=1 // pred_fallthru
      _
    %s48 = sadd.s32 0, 0
    %s49 = smul.u32 2, %s48
    %s50 = sadd.s32 0, 0
    %s51 = smul.u32 2, %s50
    %p52 = scmp.eq.s32.totalorder 0, 0
    // Predicated region
    $region18: #{tpu_custom_call.1} parent=1 // pred_check
      %p53 = pneg %p52
    $region19: #{tpu_custom_call.1} parent=1 // pred_check_branch
      %55 = sbr.rel (%p53) target = $region21
    $region20: #{tpu_custom_call.1} parent=1 // pred_region
      %56 = vst [vmem:[#allocation2] sm:$0xff] 0.0
      %57 = vst [vmem:[#allocation3] sm:$0xff] 0.0
      %58 = vst [vmem:[#allocation4] sm:$0xff] 0.0
    $region21: #{tpu_custom_call.1} parent=1 // pred_fallthru
      _
    %v59 = vld [vmem:[#allocation5] sm:$0xff]
    %v60 = vld [vmem:[#allocation5 + $0x8] sm:$0xff]
    %v61 = vld [vmem:[#allocation8] sm:$0xff]
    %v62 = vld [vmem:[#allocation8 + $0x8] sm:$0xff]
    %v63 = vmul.f32 %v59, %v61
    %v64 = vmul.f32 %v60, %v62
    %v65 = vmax.f32 %v59, 0.0
    %v66 = vmax.f32 %v60, 0.0
    %v67 = vand.u32 2147483647, %v59
    %v68 = vand.u32 2147483647, %v60
    %v69 = vsub.f32 0.0, %v67
    %v70 = vsub.f32 0.0, %v68
    %v71 = vmul.f32 %v69, 1.442695
    %v72 = vpow.pop %v71
    %v73 = vmul.f32 %v70, 1.442695
    %v74 = vpow.pop %v73
    %v75 = vadd.f32 %v72, 1.0
    %v76 = vlog2.pop %v75
    %v77 = vmul.f32 %v76, 0.6931472
    %v78 = vmul.f32 -0.5, %v72
    %v79 = vadd.f32 %v78, 1.0
    %v80 = vmul.f32 %v79, %v72
    %v81 = vand.u32 2147483647, %v72
    %vm82 = vcmp.lt.f32.partialorder %v81, 0.0004427343
    %v83 = vsel %vm82, %v80, %v77
    %v84 = vadd.f32 %v74, 1.0
    %v85 = vlog2.pop %v84
    %v86 = vmul.f32 %v85, 0.6931472
    %v87 = vmul.f32 -0.5, %v74
    %v88 = vadd.f32 %v87, 1.0
    %v89 = vmul.f32 %v88, %v74
    %v90 = vand.u32 2147483647, %v74
    %vm91 = vcmp.lt.f32.partialorder %v90, 0.0004427343
    %v92 = vsel %vm91, %v89, %v86
    %v93 = vadd.f32 %v65, %v83
    %v94 = vadd.f32 %v66, %v92
    %v95 = vld [vmem:[#allocation2] sm:$0xff]
    %v96 = vadd.f32 %v93, %v94
    %v97 = vadd.f32 %v95, %v96
    %98 = vst [vmem:[#allocation2] sm:$0xff] %v97
    %v99 = vld [vmem:[#allocation3] sm:$0xff]
    %v100 = vadd.f32 %v63, %v64
    %v101 = vadd.f32 %v99, %v100
    %102 = vst [vmem:[#allocation3] sm:$0xff] %v101
    %v103 = vld [vmem:[#allocation4] sm:$0xff]
    %v104 = vadd.f32 %v59, %v61
    %v105 = vadd.f32 %v60, %v62
    %v106 = vadd.f32 %v104, %v105
    %v107 = vadd.f32 %v103, %v106
    %108 = vst [vmem:[#allocation4] sm:$0xff] %v107
    // Predicated region
    $region22: #{tpu_custom_call.1} parent=1 // pred_check
      %p109 = pneg %p52
    $region23: #{tpu_custom_call.1} parent=1 // pred_check_branch
      %111 = sbr.rel (%p109) target = $region25
    $region24: #{tpu_custom_call.1} parent=1 // pred_region
      %v112 = vld [vmem:[#allocation2] sm:$0xff]
      %113 = vadd.xlane.f32.xlu0 %v112
      %v114 = vpop.xlane.xlu0 %113
      %v115 = vrot.slane %v114, 4
      %v116 = vadd.f32 %v114, %v115
      %v117 = vrot.slane %v116, 2
      %v118 = vadd.f32 %v116, %v117
      %v119 = vrot.slane %v118, 1
      %v120 = vadd.f32 %v118, %v119
      %s121 = vtos %v120
      %v122 = vld [vmem:[#allocation3] sm:$0xff]
      %123 = vadd.xlane.f32.xlu0 %v122
      %v124 = vpop.xlane.xlu0 %123
      %v125 = vrot.slane %v124, 4
      %v126 = vadd.f32 %v124, %v125
      %v127 = vrot.slane %v126, 2
      %v128 = vadd.f32 %v126, %v127
      %v129 = vrot.slane %v128, 1
      %v130 = vadd.f32 %v128, %v129
      %s131 = vtos %v130
      %v132 = vld [vmem:[#allocation4] sm:$0xff]
      %133 = vadd.xlane.f32.xlu0 %v132
      %v134 = vpop.xlane.xlu0 %133
      %v135 = vrot.slane %v134, 4
      %v136 = vadd.f32 %v134, %v135
      %v137 = vrot.slane %v136, 2
      %v138 = vadd.f32 %v136, %v137
      %v139 = vrot.slane %v138, 1
      %v140 = vadd.f32 %v138, %v139
      %s141 = vtos %v140
      %v142 = vlaneseq
      %v143 = vshrl.u32 %v142, 7
      %vm144 = vcmp.eq.s32.totalorder %v143, 0
      %vm145 = vcmp.eq.s32.totalorder %v143, 1
      %vm146 = vcmp.eq.s32.totalorder %v143, 2
      %v147 = vstv %s141
      %v148 = vsel %vm146, %v147, 0.0
      %v149 = vstv %s131
      %v150 = vsel %vm145, %v149, %v148
      %v151 = vstv %s121
      %v152 = vsel %vm144, %v151, %v150
      %153 = vst [vmem:[#allocation10] sm:$0xff] %v152
    $region25: #{tpu_custom_call.1} parent=1 // pred_fallthru
      _
    // Predicated region
    $region26: #{tpu_custom_call.1} parent=1 // pred_check
      _
    $region27: #{tpu_custom_call.1} parent=1 // pred_check_branch
      %155 = sbr.rel (0) target = $region29
    $region28: #{tpu_custom_call.1} parent=1 // pred_region
      %s157 = ssub.s32 128, 128
      %158 = vsyncadd [#allocation7], %s157
      %s160 = sshll.u32 [#allocation10], 4
      %s161 = int_to_ptr.vmem [resolvable:$true] %s160
      %163 = dma.vmem_to_hbm [thread:$0]  %s161, 128, %s2, [#allocation7]
    $region29: #{tpu_custom_call.1} parent=1 // pred_fallthru
      _
    // Predicated region
    $region30: #{tpu_custom_call.1} parent=1 // pred_check
      _
    $region31: #{tpu_custom_call.1} parent=1 // pred_check_branch
      %165 = sbr.rel (0) target = $region33
    $region32: #{tpu_custom_call.1} parent=1 // pred_region
      %166 = dma.done [#allocation7], 128
    $region33: #{tpu_custom_call.1} parent=1 // pred_fallthru
      _
    %167 = vsyncpa [#allocation6], 1
    %168 = vsyncpa [#allocation9], 1
    %169 = vsyncpa [#allocation7], 1

</llo_original>
